<compile_context>
chip_gen: v6e
topology: v6e:2x2x1
jax: 0.10.0
libtpu: 0.0.40
codegen_flags: <defaults>
</compile_context>

<pallas_src>
import math

import jax
import jax.numpy as jnp
from jax.experimental import pallas as pl
from jax.experimental.pallas import tpu as pltpu

IN_FEATURES = 784          # 1*28*28
NUM_NEURON = 20
OUT_FEATURES = 10

# TPU lane-friendly padded sizes (hidden / logits only; K stays 784)
H_PAD = 128                # hidden 20 -> 128, zero-padded
OUT_PAD = 128              # logits 10 -> 128, pad lanes masked via large-negative bias
NEG = -1e30


def _round_up(x, m):
    return (x + m - 1) // m * m


def _cdiv(a, b):
    return (a + b - 1) // b


# ----------------------------- Pallas kernel ---------------------------------
def _net_normal_kernel(x_ref, w1_ref, b1_ref, w2_ref, b2_ref, o_ref):
    # x_ref:  (TB, 784)        f32    (streamed per grid step)
    # w1_ref: (784, H_PAD)     bf16   (resident: constant index_map)
    # b1_ref: (1, H_PAD)       f32
    # w2_ref: (H_PAD, OUT_PAD) bf16
    # b2_ref: (1, OUT_PAD)     f32    (pad lanes = -1e30)
    # o_ref:  (TB, OUT_PAD)    f32
    x = x_ref[...].astype(jnp.bfloat16)          # on-chip cast, hidden under DMA

    h = jnp.dot(x, w1_ref[...], preferred_element_type=jnp.float32) + b1_ref[...]
    h = jnp.maximum(h, 0.0)                      # F.relu (f32)

    logits = jnp.dot(h.astype(jnp.bfloat16), w2_ref[...],
                     preferred_element_type=jnp.float32) + b2_ref[...]

    # F.log_softmax(dim=1); padded logit lanes hold -1e30 -> exp underflows to 0,
    # so normalization runs over the 10 real classes only.
    m = jnp.max(logits, axis=-1, keepdims=True)
    shifted = logits - m
    lse = jnp.log(jnp.sum(jnp.exp(shifted), axis=-1, keepdims=True))
    o_ref[...] = (shifted - lse).astype(o_ref.dtype)


# ------------------------------ wrapper ---------------------------------------
def net_normal_forward(x, params, *, tb=1024):
    """x: (B, 1, 28, 28) or (B, 784) float32. Returns (B, 10) log-probs (f32)."""
    x_flat = x.reshape(x.shape[0], -1).astype(jnp.float32)
    B = x_flat.shape[0]

    # Batch tiling: TB multiple of 16 (bf16 sublane packing), small batch overshoot
    # (<= 15 rows per step), and >= 2 balanced steps for large B (v7x megacore).
    nsteps = _cdiv(B, tb)
    if nsteps == 1 and B >= 512:
        nsteps = 2
    TB = _round_up(_cdiv(B, nsteps), 16)
    B_pad = TB * nsteps

    if B_pad != B:
        x_flat = jnp.pad(x_flat, ((0, B_pad - B), (0, 0)))

    w1, b1, w2, b2 = params["w1"], params["b1"], params["w2"], params["b2"]

    grid = (nsteps,)
    cost = pl.CostEstimate(
        flops=2 * B_pad * (IN_FEATURES * H_PAD + H_PAD * OUT_PAD),
        transcendentals=B_pad * (OUT_PAD + 1),
        bytes_accessed=(B_pad * IN_FEATURES * 4                      # x (f32)
                        + (IN_FEATURES * H_PAD + H_PAD * OUT_PAD) * 2  # weights (bf16)
                        + (H_PAD + OUT_PAD) * 4                      # biases (f32)
                        + B_pad * OUT_PAD * 4),                      # output (f32)
    )

    out_pad = pl.pallas_call(
        _net_normal_kernel,
        out_shape=jax.ShapeDtypeStruct((B_pad, OUT_PAD), jnp.float32),
        grid=grid,
        in_specs=[
            # activations: streamed; lane dim 784 == full array dim (lane rule OK)
            pl.BlockSpec((TB, IN_FEATURES), lambda i: (i, 0)),
            # weights / biases: resident across grid steps (constant index_map)
            pl.BlockSpec((IN_FEATURES, H_PAD), lambda i: (0, 0)),
            pl.BlockSpec((1, H_PAD), lambda i: (0, 0)),
            pl.BlockSpec((H_PAD, OUT_PAD), lambda i: (0, 0)),
            pl.BlockSpec((1, OUT_PAD), lambda i: (0, 0)),
        ],
        out_specs=pl.BlockSpec((TB, OUT_PAD), lambda i: (i, 0)),
        compiler_params=pltpu.CompilerParams(
            dimension_semantics=("parallel",),   # shard batch tiles across TCs (v7x)
            vmem_limit_bytes=32 * 1024 * 1024,   # usage ~8 MiB at TB=1024 (dbl-buffered)
        ),
        cost_estimate=cost,
    )(x_flat, w1, b1, w2, b2)

    return out_pad[:B, :OUT_FEATURES]


# --------------------------- parameter construction --------------------------
def pack_params(w1, b1, w2, b2):
    """Pad dense f32 params to lane-friendly shapes; bf16 weights, f32 biases."""
    w1_p = jnp.zeros((IN_FEATURES, H_PAD), jnp.float32).at[:, :NUM_NEURON].set(w1)
    b1_p = jnp.zeros((1, H_PAD), jnp.float32).at[0, :NUM_NEURON].set(b1)
    w2_p = jnp.zeros((H_PAD, OUT_PAD), jnp.float32).at[:NUM_NEURON, :OUT_FEATURES].set(w2)
    # pad logit lanes get a huge negative bias so softmax ignores them
    b2_p = jnp.full((1, OUT_PAD), NEG, jnp.float32).at[0, :OUT_FEATURES].set(b2)
    return {"w1": w1_p.astype(jnp.bfloat16), "b1": b1_p,
            "w2": w2_p.astype(jnp.bfloat16), "b2": b2_p}


def make_params(key):
    """nn.Linear default init (kaiming_uniform(a=sqrt(5)) -> U(-1/sqrt(fan_in), ...))."""
    k1w, k1b, k2w, k2b = jax.random.split(key, 4)

    def linear_init(kw, kb, fan_in, fan_out):
        bound = 1.0 / math.sqrt(fan_in)
        w = jax.random.uniform(kw, (fan_in, fan_out), jnp.float32, -bound, bound)
        b = jax.random.uniform(kb, (fan_out,), jnp.float32, -bound, bound)
        return w, b

    w1, b1 = linear_init(k1w, k1b, IN_FEATURES, NUM_NEURON)
    w2, b2 = linear_init(k2w, k2b, NUM_NEURON, OUT_FEATURES)
    params = pack_params(w1, b1, w2, b2)
    # keep f32 originals around for the reference check in __main__
    params.update({"_w1": w1, "_b1": b1, "_w2": w2, "_b2": b2})
    return params


# ------------------------------------ main ------------------------------------
if __name__ == "__main__":
    key = jax.random.PRNGKey(0)
    k_params, k_x = jax.random.split(key)

    params = make_params(k_params)

    B = 2
    x = jax.random.normal(k_x, (B, 1, 28, 28), dtype=jnp.float32)   # NCHW MNIST shape

    out = net_normal_forward(x, params)
    out = jax.block_until_ready(out)

    assert out.shape == (B, OUT_FEATURES)
    # log_softmax rows must exponentiate-sum to 1
    assert jnp.allclose(jnp.sum(jnp.exp(out), axis=1), 1.0, atol=1e-4)

    # Pure-JAX reference matching the kernel's bf16 storage casts (f32 math).
    x_flat = x.reshape(B, -1)
    xb = x_flat.astype(jnp.bfloat16).astype(jnp.float32)
    w1f = params["_w1"].astype(jnp.bfloat16).astype(jnp.float32)
    w2f = params["_w2"].astype(jnp.bfloat16).astype(jnp.float32)
    h_ref = jnp.maximum(xb @ w1f + params["_b1"], 0.0)
    logits_ref = h_ref.astype(jnp.bfloat16).astype(jnp.float32) @ w2f + params["_b2"]
    ref = jax.nn.log_softmax(logits_ref, axis=-1)
    assert jnp.allclose(out, ref, atol=2e-2, rtol=2e-2)

    print("KERNEL_OK")
</pallas_src>

<mosaic_0001>
module attributes {stable_mosaic.version = 11 : i64} {
  func.func @_net_normal_kernel(%arg0: i32, %arg1: memref<16x784xf32, #tpu.memory_space<vmem>>, %arg2: memref<784x128xbf16, #tpu.memory_space<vmem>>, %arg3: memref<1x128xf32, #tpu.memory_space<vmem>>, %arg4: memref<128x128xbf16, #tpu.memory_space<vmem>>, %arg5: memref<1x128xf32, #tpu.memory_space<vmem>>, %arg6: memref<16x128xf32, #tpu.memory_space<vmem>>) attributes {dimension_semantics = [#tpu.dimension_semantics<parallel>], iteration_bounds = array<i64: 1>, scalar_prefetch = 0 : i64, scratch_operands = 0 : i64, tpu.core_type = #tpu.core_type<tc>, window_params = [{transform_indices = @transform_0, window_bounds = array<i64: 16, 784>}, {pipeline_mode = #tpu.pipeline_mode<synchronous>, transform_indices = @transform_1, window_bounds = array<i64: 784, 128>}, {pipeline_mode = #tpu.pipeline_mode<synchronous>, transform_indices = @transform_2, window_bounds = array<i64: 1, 128>}, {pipeline_mode = #tpu.pipeline_mode<synchronous>, transform_indices = @transform_3, window_bounds = array<i64: 128, 128>}, {pipeline_mode = #tpu.pipeline_mode<synchronous>, transform_indices = @transform_4, window_bounds = array<i64: 1, 128>}, {transform_indices = @transform_5, window_bounds = array<i64: 16, 128>}]} {
    %c0 = arith.constant 0 : index
    %c0_0 = arith.constant 0 : index
    %0 = vector.load %arg1[%c0, %c0_0] : memref<16x784xf32, #tpu.memory_space<vmem>>, vector<16x784xf32>
    %1 = arith.truncf %0 : vector<16x784xf32> to vector<16x784xbf16>
    %c0_1 = arith.constant 0 : index
    %c0_2 = arith.constant 0 : index
    %2 = vector.load %arg2[%c0_1, %c0_2] : memref<784x128xbf16, #tpu.memory_space<vmem>>, vector<784x128xbf16>
    %cst = arith.constant dense<0.000000e+00> : vector<16x128xf32>
    %3 = tpu.matmul %1, %2, %cst {dimension_numbers = #tpu.dot_dimension_numbers<[1], [0], [0], [1], [0, 0, 1, 1], [], []>} : vector<16x784xbf16>, vector<784x128xbf16>, vector<16x128xf32> -> vector<16x128xf32>
    %c0_3 = arith.constant 0 : index
    %c0_4 = arith.constant 0 : index
    %4 = vector.load %arg3[%c0_3, %c0_4] : memref<1x128xf32, #tpu.memory_space<vmem>>, vector<1x128xf32>
    %5 = vector.broadcast %4 : vector<1x128xf32> to vector<16x128xf32>
    %6 = arith.addf %3, %5 : vector<16x128xf32>
    %cst_5 = arith.constant 0.000000e+00 : f32
    %7 = vector.broadcast %cst_5 : f32 to vector<16x128xf32>
    %8 = arith.maximumf %6, %7 : vector<16x128xf32>
    %9 = arith.truncf %8 : vector<16x128xf32> to vector<16x128xbf16>
    %c0_6 = arith.constant 0 : index
    %c0_7 = arith.constant 0 : index
    %10 = vector.load %arg4[%c0_6, %c0_7] : memref<128x128xbf16, #tpu.memory_space<vmem>>, vector<128x128xbf16>
    %cst_8 = arith.constant dense<0.000000e+00> : vector<16x128xf32>
    %11 = tpu.matmul %9, %10, %cst_8 {dimension_numbers = #tpu.dot_dimension_numbers<[1], [0], [0], [1], [0, 0, 1, 1], [], []>} : vector<16x128xbf16>, vector<128x128xbf16>, vector<16x128xf32> -> vector<16x128xf32>
    %c0_9 = arith.constant 0 : index
    %c0_10 = arith.constant 0 : index
    %12 = vector.load %arg5[%c0_9, %c0_10] : memref<1x128xf32, #tpu.memory_space<vmem>>, vector<1x128xf32>
    %13 = vector.broadcast %12 : vector<1x128xf32> to vector<16x128xf32>
    %14 = arith.addf %11, %13 : vector<16x128xf32>
    %cst_11 = arith.constant dense<0xFF800000> : vector<16xf32>
    %15 = vector.multi_reduction <maximumf>, %14, %cst_11 [1] : vector<16x128xf32> to vector<16xf32>
    %16 = vector.shape_cast %15 : vector<16xf32> to vector<16x1xf32>
    %17 = vector.broadcast %16 : vector<16x1xf32> to vector<16x128xf32>
    %18 = arith.subf %14, %17 : vector<16x128xf32>
    %19 = math.exp %18 : vector<16x128xf32>
    %cst_12 = arith.constant dense<0.000000e+00> : vector<16xf32>
    %20 = vector.multi_reduction <add>, %19, %cst_12 [1] : vector<16x128xf32> to vector<16xf32>
    %21 = vector.shape_cast %20 : vector<16xf32> to vector<16x1xf32>
    %22 = math.log %21 : vector<16x1xf32>
    %23 = vector.broadcast %22 : vector<16x1xf32> to vector<16x128xf32>
    %24 = arith.subf %18, %23 : vector<16x128xf32>
    %c0_13 = arith.constant 0 : index
    %c0_14 = arith.constant 0 : index
    %25 = vector.load %arg6[%c0_13, %c0_14] : memref<16x128xf32, #tpu.memory_space<vmem>>, vector<16x128xf32>
    tpu.vector_store %arg6[%c0_13, %c0_14], %24 {strides = array<i32>} : memref<16x128xf32, #tpu.memory_space<vmem>>, vector<16x128xf32>,
    return
  }
  func.func @transform_0(%arg0: i32) -> (i32, i32) {
    %c0_i32 = arith.constant 0 : i32
    %c0_i32_0 = arith.constant 0 : i32
    return %arg0, %c0_i32 : i32, i32
  }
  func.func @transform_1(%arg0: i32) -> (i32, i32) {
    %c0_i32 = arith.constant 0 : i32
    %c0_i32_0 = arith.constant 0 : i32
    %c0_i32_1 = arith.constant 0 : i32
    return %c0_i32, %c0_i32_0 : i32, i32
  }
  func.func @transform_2(%arg0: i32) -> (i32, i32) {
    %c0_i32 = arith.constant 0 : i32
    %c0_i32_0 = arith.constant 0 : i32
    %c0_i32_1 = arith.constant 0 : i32
    return %c0_i32, %c0_i32_0 : i32, i32
  }
  func.func @transform_3(%arg0: i32) -> (i32, i32) {
    %c0_i32 = arith.constant 0 : i32
    %c0_i32_0 = arith.constant 0 : i32
    %c0_i32_1 = arith.constant 0 : i32
    return %c0_i32, %c0_i32_0 : i32, i32
  }
  func.func @transform_4(%arg0: i32) -> (i32, i32) {
    %c0_i32 = arith.constant 0 : i32
    %c0_i32_0 = arith.constant 0 : i32
    %c0_i32_1 = arith.constant 0 : i32
    return %c0_i32, %c0_i32_0 : i32, i32
  }
  func.func @transform_5(%arg0: i32) -> (i32, i32) {
    %c0_i32 = arith.constant 0 : i32
    %c0_i32_0 = arith.constant 0 : i32
    return %arg0, %c0_i32 : i32, i32
  }
}

</mosaic_0001>

<llo_original>
// kernel: tpu_custom_call.1
$region0: #{tpu_custom_call.1}
  #allocation0 [shape = 'u32[]', space=smem, size = 0x4, offset = 0x4, fixed_abs, tag = 'smem constant byte address 0x4 - core index']
  #allocation1 [shape = 'u32[144,128]{1,0:T(1,128)}', space=vmem, size = 0x12000, scoped, tag = 'internal scratch']
  %s0 = inlined_call_operand.hbm [shape: f32[16,784], index: 0, kind: input, shape index: {}]
  %s1 = inlined_call_operand.hbm [shape: bf16[784,128], index: 1, kind: input, shape index: {}]
  %s2 = inlined_call_operand.vmem [shape: f32[1,128], index: 2, kind: input, shape index: {}]
  %s3 = inlined_call_operand.hbm [shape: bf16[128,128], index: 3, kind: input, shape index: {}]
  %s4 = inlined_call_operand.vmem [shape: f32[1,128], index: 4, kind: input, shape index: {}]
  %s5 = inlined_call_operand.hbm [shape: f32[16,128], index: 5, kind: output, shape index: {}]
  %s6 = sld [smem:[#allocation0]]
  $region42: #{tpu_custom_call.1} parent=0
    _
  %s8 = ssub.s32 1, %s6
  %s9 = scalar_select 0, %s8, %s6
  $region1: #{tpu_custom_call.1} parent=0
    #allocation2 [shape = 'u8[57344]{0}', space=vmem, size = 0xe000, scoped, tag = 'input window, operand 0, single buffered']
    #allocation3 [shape = 's32[1]{0}', space=sflag, size = 0x4, scoped, tag = 'scoped memory for tpu_custom_call.1']
    #allocation4 [shape = 's32[1]{0}', space=sflag, size = 0x4, scoped, tag = 'scoped memory for tpu_custom_call.1']
    #allocation5 [shape = 'u8[200704]{0}', space=vmem, size = 0x31000, scoped, tag = 'input window, operand 1, single buffered']
    #allocation6 [shape = 's32[1]{0}', space=sflag, size = 0x4, scoped, tag = 'scoped memory for tpu_custom_call.1']
    #allocation7 [shape = 'u8[32768]{0}', space=vmem, size = 0x8000, scoped, tag = 'input window, operand 3, single buffered']
    #allocation8 [shape = 'u8[8192]{0}', space=vmem, size = 0x2000, scoped, tag = 'output window, operand 0, single buffered']
    %10 = vsyncpa [#allocation3], 0
    %11 = vsyncpa [#allocation6], 0
    %12 = vsyncpa [#allocation4], 0
    // Predicated region
    $region2: #{tpu_custom_call.1} parent=1 // pred_check
      _
    $region3: #{tpu_custom_call.1} parent=1 // pred_check_branch
      %14 = sbr.rel (0) target = $region5
    $region4: #{tpu_custom_call.1} parent=1 // pred_region
      %s16 = ssub.s32 1792, 1792
      %17 = vsyncadd [#allocation3], %s16
      %s18 = sshll.u32 [#allocation2], 4
      %s19 = int_to_ptr.vmem [resolvable:$true] %s18
      %24 = dma.hbm_to_vmem [thread:$0]  %s0, 1792, %s19, [#allocation3], 896, 896, 56
    $region5: #{tpu_custom_call.1} parent=1 // pred_fallthru
      _
    // Predicated region
    $region6: #{tpu_custom_call.1} parent=1 // pred_check
      _
    $region7: #{tpu_custom_call.1} parent=1 // pred_check_branch
      %26 = sbr.rel (0) target = $region9
    $region8: #{tpu_custom_call.1} parent=1 // pred_region
      %s28 = ssub.s32 6272, 6272
      %29 = vsyncadd [#allocation6], %s28
      %s30 = sshll.u32 [#allocation5], 4
      %s31 = int_to_ptr.vmem [resolvable:$true] %s30
      %36 = dma.hbm_to_vmem [thread:$0]  %s1, 6272, %s31, [#allocation6], 64, 64, 4
    $region9: #{tpu_custom_call.1} parent=1 // pred_fallthru
      _
    // Predicated region
    $region10: #{tpu_custom_call.1} parent=1 // pred_check
      _
    $region11: #{tpu_custom_call.1} parent=1 // pred_check_branch
      %38 = sbr.rel (0) target = $region13
    $region12: #{tpu_custom_call.1} parent=1 // pred_region
      _
    $region13: #{tpu_custom_call.1} parent=1 // pred_fallthru
      _
    // Predicated region
    $region14: #{tpu_custom_call.1} parent=1 // pred_check
      _
    $region15: #{tpu_custom_call.1} parent=1 // pred_check_branch
      %40 = sbr.rel (0) target = $region17
    $region16: #{tpu_custom_call.1} parent=1 // pred_region
      %s42 = ssub.s32 1024, 1024
      %43 = vsyncadd [#allocation6], %s42
      %s44 = sshll.u32 [#allocation7], 4
      %s45 = int_to_ptr.vmem [resolvable:$true] %s44
      %50 = dma.hbm_to_vmem [thread:$0]  %s3, 1024, %s45, [#allocation6], 64, 64, 4
    $region17: #{tpu_custom_call.1} parent=1 // pred_fallthru
      _
    // Predicated region
    $region18: #{tpu_custom_call.1} parent=1 // pred_check
      _
    $region19: #{tpu_custom_call.1} parent=1 // pred_check_branch
      %52 = sbr.rel (0) target = $region21
    $region20: #{tpu_custom_call.1} parent=1 // pred_region
      _
    $region21: #{tpu_custom_call.1} parent=1 // pred_fallthru
      _
    // Predicated region
    $region22: #{tpu_custom_call.1} parent=1 // pred_check
      _
    $region23: #{tpu_custom_call.1} parent=1 // pred_check_branch
      %54 = sbr.rel (0) target = $region25
    $region24: #{tpu_custom_call.1} parent=1 // pred_region
      %55 = dma.done [#allocation3], 1792
    $region25: #{tpu_custom_call.1} parent=1 // pred_fallthru
      _
    // Predicated region
    $region26: #{tpu_custom_call.1} parent=1 // pred_check
      _
    $region27: #{tpu_custom_call.1} parent=1 // pred_check_branch
      %57 = sbr.rel (0) target = $region29
    $region28: #{tpu_custom_call.1} parent=1 // pred_region
      %58 = dma.done [#allocation6], 6272
    $region29: #{tpu_custom_call.1} parent=1 // pred_fallthru
      _
    // Predicated region
    $region30: #{tpu_custom_call.1} parent=1 // pred_check
      _
    $region31: #{tpu_custom_call.1} parent=1 // pred_check_branch
      %60 = sbr.rel (0) target = $region33
    $region32: #{tpu_custom_call.1} parent=1 // pred_region
      %61 = dma.done [#allocation6], 1024
    $region33: #{tpu_custom_call.1} parent=1 // pred_fallthru
      _
    %v63 = vld [vmem:[#allocation2] sm:$0xff]
    %v64 = vld [vmem:[#allocation2 + $0x8] sm:$0xff]
    %v65 = vld [vmem:[#allocation2 + $0x10] sm:$0xff]
    %v66 = vld [vmem:[#allocation2 + $0x18] sm:$0xff]
    %v67 = vld [vmem:[#allocation2 + $0x20] sm:$0xff]
    %v68 = vld [vmem:[#allocation2 + $0x28] sm:$0xff]
    %v69 = vld [vmem:[#allocation2 + $0x30] sm:$0xff]
    %v70 = vld [vmem:[#allocation2 + $0x38] sm:$0xff]
    %v71 = vld [vmem:[#allocation2 + $0x40] sm:$0xff]
    %v72 = vld [vmem:[#allocation2 + $0x48] sm:$0xff]
    %v73 = vld [vmem:[#allocation2 + $0x50] sm:$0xff]
    %v74 = vld [vmem:[#allocation2 + $0x58] sm:$0xff]
    %v75 = vld [vmem:[#allocation2 + $0x60] sm:$0xff]
    %v76 = vld [vmem:[#allocation2 + $0x68] sm:$0xff]
    %v77 = vpack.c.bf16 %v70, %v63
    %v78 = vpack.c.bf16 %v71, %v64
    %v79 = vpack.c.bf16 %v72, %v65
    %v80 = vpack.c.bf16 %v73, %v66
    %v81 = vpack.c.bf16 %v74, %v67
    %v82 = vpack.c.bf16 %v75, %v68
    %v83 = vpack.c.bf16 %v76, %v69
    %v84 = vld [vmem:[#allocation5] sm:$0xf]
    %v85 = vld [vmem:[#allocation5 + $0x4] sm:$0xf]
    %v86 = vld [vmem:[#allocation5 + $0x8] sm:$0xf]
    %v87 = vld [vmem:[#allocation5 + $0xc] sm:$0xf]
    %v88 = vld [vmem:[#allocation5 + $0x10] sm:$0xf]
    %v89 = vld [vmem:[#allocation5 + $0x14] sm:$0xf]
    %v90 = vld [vmem:[#allocation5 + $0x18] sm:$0xf]
    %v91 = vld [vmem:[#allocation5 + $0x1c] sm:$0xf]
    %v92 = vld [vmem:[#allocation5 + $0x20] sm:$0xf]
    %v93 = vld [vmem:[#allocation5 + $0x24] sm:$0xf]
    %v94 = vld [vmem:[#allocation5 + $0x28] sm:$0xf]
    %v95 = vld [vmem:[#allocation5 + $0x2c] sm:$0xf]
    %v96 = vld [vmem:[#allocation5 + $0x30] sm:$0xf]
    %v97 = vld [vmem:[#allocation5 + $0x34] sm:$0xf]
    %v98 = vld [vmem:[#allocation5 + $0x38] sm:$0xf]
    %v99 = vld [vmem:[#allocation5 + $0x3c] sm:$0xf]
    %v100 = vld [vmem:[#allocation5 + $0x40] sm:$0xf]
    %v101 = vld [vmem:[#allocation5 + $0x44] sm:$0xf]
    %v102 = vld [vmem:[#allocation5 + $0x48] sm:$0xf]
    %v103 = vld [vmem:[#allocation5 + $0x4c] sm:$0xf]
    %v104 = vld [vmem:[#allocation5 + $0x50] sm:$0xf]
    %v105 = vld [vmem:[#allocation5 + $0x54] sm:$0xf]
    %v106 = vld [vmem:[#allocation5 + $0x58] sm:$0xf]
    %v107 = vld [vmem:[#allocation5 + $0x5c] sm:$0xf]
    %v108 = vld [vmem:[#allocation5 + $0x60] sm:$0xf]
    %v109 = vld [vmem:[#allocation5 + $0x64] sm:$0xf]
    %v110 = vld [vmem:[#allocation5 + $0x68] sm:$0xf]
    %v111 = vld [vmem:[#allocation5 + $0x6c] sm:$0xf]
    %v112 = vld [vmem:[#allocation5 + $0x70] sm:$0xf]
    %v113 = vld [vmem:[#allocation5 + $0x74] sm:$0xf]
    %v114 = vld [vmem:[#allocation5 + $0x78] sm:$0xf]
    %v115 = vld [vmem:[#allocation5 + $0x7c] sm:$0xf]
    %v116 = vld [vmem:[#allocation5 + $0x80] sm:$0xf]
    %v117 = vld [vmem:[#allocation5 + $0x84] sm:$0xf]
    %v118 = vld [vmem:[#allocation5 + $0x88] sm:$0xf]
    %v119 = vld [vmem:[#allocation5 + $0x8c] sm:$0xf]
    %v120 = vld [vmem:[#allocation5 + $0x90] sm:$0xf]
    %v121 = vld [vmem:[#allocation5 + $0x94] sm:$0xf]
    %v122 = vld [vmem:[#allocation5 + $0x98] sm:$0xf]
    %v123 = vld [vmem:[#allocation5 + $0x9c] sm:$0xf]
    %v124 = vld [vmem:[#allocation5 + $0xa0] sm:$0xf]
    %v125 = vld [vmem:[#allocation5 + $0xa4] sm:$0xf]
    %v126 = vld [vmem:[#allocation5 + $0xa8] sm:$0xf]
    %v127 = vld [vmem:[#allocation5 + $0xac] sm:$0xf]
    %v128 = vld [vmem:[#allocation5 + $0xb0] sm:$0xf]
    %v129 = vld [vmem:[#allocation5 + $0xb4] sm:$0xf]
    %v130 = vld [vmem:[#allocation5 + $0xb8] sm:$0xf]
    %v131 = vld [vmem:[#allocation5 + $0xbc] sm:$0xf]
    %v132 = vld [vmem:[#allocation5 + $0xc0] sm:$0xf]
    %v133 = vld [vmem:[#allocation5 + $0xc4] sm:$0xf]
    %v134 = vld [vmem:[#allocation5 + $0xc8] sm:$0xf]
    %v135 = vld [vmem:[#allocation5 + $0xcc] sm:$0xf]
    %v136 = vld [vmem:[#allocation5 + $0xd0] sm:$0xf]
    %v137 = vld [vmem:[#allocation5 + $0xd4] sm:$0xf]
    %v138 = vld [vmem:[#allocation5 + $0xd8] sm:$0xf]
    %v139 = vld [vmem:[#allocation5 + $0xdc] sm:$0xf]
    %v140 = vld [vmem:[#allocation5 + $0xe0] sm:$0xf]
    %v141 = vld [vmem:[#allocation5 + $0xe4] sm:$0xf]
    %v142 = vld [vmem:[#allocation5 + $0xe8] sm:$0xf]
    %v143 = vld [vmem:[#allocation5 + $0xec] sm:$0xf]
    %v144 = vld [vmem:[#allocation5 + $0xf0] sm:$0xf]
    %v145 = vld [vmem:[#allocation5 + $0xf4] sm:$0xf]
    %v146 = vld [vmem:[#allocation5 + $0xf8] sm:$0xf]
    %v147 = vld [vmem:[#allocation5 + $0xfc] sm:$0xf]
    %v148 = vld [vmem:[#allocation5 + $0x100] sm:$0xf]
    %v149 = vld [vmem:[#allocation5 + $0x104] sm:$0xf]
    %v150 = vld [vmem:[#allocation5 + $0x108] sm:$0xf]
    %v151 = vld [vmem:[#allocation5 + $0x10c] sm:$0xf]
    %v152 = vld [vmem:[#allocation5 + $0x110] sm:$0xf]
    %v153 = vld [vmem:[#allocation5 + $0x114] sm:$0xf]
    %v154 = vld [vmem:[#allocation5 + $0x118] sm:$0xf]
    %v155 = vld [vmem:[#allocation5 + $0x11c] sm:$0xf]
    %v156 = vld [vmem:[#allocation5 + $0x120] sm:$0xf]
    %v157 = vld [vmem:[#allocation5 + $0x124] sm:$0xf]
    %v158 = vld [vmem:[#allocation5 + $0x128] sm:$0xf]
    %v159 = vld [vmem:[#allocation5 + $0x12c] sm:$0xf]
    %v160 = vld [vmem:[#allocation5 + $0x130] sm:$0xf]
    %v161 = vld [vmem:[#allocation5 + $0x134] sm:$0xf]
    %v162 = vld [vmem:[#allocation5 + $0x138] sm:$0xf]
    %v163 = vld [vmem:[#allocation5 + $0x13c] sm:$0xf]
    %v164 = vld [vmem:[#allocation5 + $0x140] sm:$0xf]
    %v165 = vld [vmem:[#allocation5 + $0x144] sm:$0xf]
    %v166 = vld [vmem:[#allocation5 + $0x148] sm:$0xf]
    %v167 = vld [vmem:[#allocation5 + $0x14c] sm:$0xf]
    %v168 = vld [vmem:[#allocation5 + $0x150] sm:$0xf]
    %v169 = vld [vmem:[#allocation5 + $0x154] sm:$0xf]
    %v170 = vld [vmem:[#allocation5 + $0x158] sm:$0xf]
    %v171 = vld [vmem:[#allocation5 + $0x15c] sm:$0xf]
    %v172 = vld [vmem:[#allocation5 + $0x160] sm:$0xf]
    %v173 = vld [vmem:[#allocation5 + $0x164] sm:$0xf]
    %v174 = vld [vmem:[#allocation5 + $0x168] sm:$0xf]
    %v175 = vld [vmem:[#allocation5 + $0x16c] sm:$0xf]
    %v176 = vld [vmem:[#allocation5 + $0x170] sm:$0xf]
    %v177 = vld [vmem:[#allocation5 + $0x174] sm:$0xf]
    %v178 = vld [vmem:[#allocation5 + $0x178] sm:$0xf]
    %v179 = vld [vmem:[#allocation5 + $0x17c] sm:$0xf]
    %v180 = vld [vmem:[#allocation5 + $0x180] sm:$0xf]
    %v181 = vld [vmem:[#allocation5 + $0x184] sm:$0xf]
    %v182 = vld [vmem:[%s2] sm:$0x1]
    %v184 = vlaneseq
    %v185 = vshrl.u32 %v184, 7
    %v186 = vsub.s32 0, %v185
    %v187 = vrot.slane %v182, %v186
    %v287 = vunpack.c.l.b16 %v84
    %v288 = vunpack.c.l.b16 %v85
    %v289 = vunpack.c.l.b16 %v86
    %v290 = vunpack.c.l.b16 %v87
    %v291 = vunpack.c.l.b16 %v88
    %v292 = vunpack.c.l.b16 %v89
    %v293 = vunpack.c.l.b16 %v90
    %v294 = vunpack.c.l.b16 %v91
    %v295 = vunpack.c.l.b16 %v92
    %v296 = vunpack.c.l.b16 %v93
    %v297 = vunpack.c.l.b16 %v94
    %v298 = vunpack.c.l.b16 %v95
    %v299 = vunpack.c.l.b16 %v96
    %v300 = vunpack.c.l.b16 %v97
    %v301 = vunpack.c.l.b16 %v98
    %v302 = vunpack.c.l.b16 %v99
    %v303 = vunpack.c.l.b16 %v100
    %v304 = vunpack.c.l.b16 %v101
    %v305 = vunpack.c.l.b16 %v102
    %v306 = vunpack.c.l.b16 %v103
    %v307 = vunpack.c.l.b16 %v104
    %v308 = vunpack.c.l.b16 %v105
    %v309 = vunpack.c.l.b16 %v106
    %v310 = vunpack.c.l.b16 %v107
    %v311 = vunpack.c.l.b16 %v108
    %v312 = vunpack.c.l.b16 %v109
    %v313 = vunpack.c.l.b16 %v110
    %v314 = vunpack.c.l.b16 %v111
    %v315 = vunpack.c.l.b16 %v112
    %v316 = vunpack.c.l.b16 %v113
    %v317 = vunpack.c.l.b16 %v114
    %v318 = vunpack.c.l.b16 %v115
    %v319 = vunpack.c.l.b16 %v116
    %v320 = vunpack.c.l.b16 %v117
    %v321 = vunpack.c.l.b16 %v118
    %v322 = vunpack.c.l.b16 %v119
    %v323 = vunpack.c.l.b16 %v120
    %v324 = vunpack.c.l.b16 %v121
    %v325 = vunpack.c.l.b16 %v122
    %v326 = vunpack.c.l.b16 %v123
    %v327 = vunpack.c.l.b16 %v124
    %v328 = vunpack.c.l.b16 %v125
    %v329 = vunpack.c.l.b16 %v126
    %v330 = vunpack.c.l.b16 %v127
    %v331 = vunpack.c.l.b16 %v128
    %v332 = vunpack.c.l.b16 %v129
    %v333 = vunpack.c.l.b16 %v130
    %v334 = vunpack.c.l.b16 %v131
    %v335 = vunpack.c.l.b16 %v132
    %v336 = vunpack.c.l.b16 %v133
    %v337 = vunpack.c.l.b16 %v134
    %v338 = vunpack.c.l.b16 %v135
    %v339 = vunpack.c.l.b16 %v136
    %v340 = vunpack.c.l.b16 %v137
    %v341 = vunpack.c.l.b16 %v138
    %v342 = vunpack.c.l.b16 %v139
    %v343 = vunpack.c.l.b16 %v140
    %v344 = vunpack.c.l.b16 %v141
    %v345 = vunpack.c.l.b16 %v142
    %v346 = vunpack.c.l.b16 %v143
    %v347 = vunpack.c.l.b16 %v144
    %v348 = vunpack.c.l.b16 %v145
    %v349 = vunpack.c.l.b16 %v146
    %v350 = vunpack.c.l.b16 %v147
    %v351 = vunpack.c.l.b16 %v148
    %v352 = vunpack.c.l.b16 %v149
    %v353 = vunpack.c.l.b16 %v150
    %v354 = vunpack.c.l.b16 %v151
    %v355 = vunpack.c.l.b16 %v152
    %v356 = vunpack.c.l.b16 %v153
    %v357 = vunpack.c.l.b16 %v154
    %v358 = vunpack.c.l.b16 %v155
    %v359 = vunpack.c.l.b16 %v156
    %v360 = vunpack.c.l.b16 %v157
    %v361 = vunpack.c.l.b16 %v158
    %v362 = vunpack.c.l.b16 %v159
    %v363 = vunpack.c.l.b16 %v160
    %v364 = vunpack.c.l.b16 %v161
    %v365 = vunpack.c.l.b16 %v162
    %v366 = vunpack.c.l.b16 %v163
    %v367 = vunpack.c.l.b16 %v164
    %v368 = vunpack.c.l.b16 %v165
    %v369 = vunpack.c.l.b16 %v166
    %v370 = vunpack.c.l.b16 %v167
    %v371 = vunpack.c.l.b16 %v168
    %v372 = vunpack.c.l.b16 %v169
    %v373 = vunpack.c.l.b16 %v170
    %v374 = vunpack.c.l.b16 %v171
    %v375 = vunpack.c.l.b16 %v172
    %v376 = vunpack.c.l.b16 %v173
    %v377 = vunpack.c.l.b16 %v174
    %v378 = vunpack.c.l.b16 %v175
    %v379 = vunpack.c.l.b16 %v176
    %v380 = vunpack.c.l.b16 %v177
    %v381 = vunpack.c.l.b16 %v178
    %v382 = vunpack.c.l.b16 %v179
    %v383 = vunpack.c.l.b16 %v180
    %v384 = vunpack.c.l.b16 %v181
    %v385 = vpack.c.b16 %v288, %v287
    %v386 = vpack.c.b16 %v290, %v289
    %v387 = vpack.c.b16 %v292, %v291
    %v388 = vpack.c.b16 %v294, %v293
    %v389 = vpack.c.b16 %v296, %v295
    %v390 = vpack.c.b16 %v298, %v297
    %v391 = vpack.c.b16 %v300, %v299
    %v392 = vpack.c.b16 %v302, %v301
    %v393 = vpack.c.b16 %v304, %v303
    %v394 = vpack.c.b16 %v306, %v305
    %v395 = vpack.c.b16 %v308, %v307
    %v396 = vpack.c.b16 %v310, %v309
    %v397 = vpack.c.b16 %v312, %v311
    %v398 = vpack.c.b16 %v314, %v313
    %v399 = vpack.c.b16 %v316, %v315
    %v400 = vpack.c.b16 %v318, %v317
    %v401 = vpack.c.b16 %v320, %v319
    %v402 = vpack.c.b16 %v322, %v321
    %v403 = vpack.c.b16 %v324, %v323
    %v404 = vpack.c.b16 %v326, %v325
    %v405 = vpack.c.b16 %v328, %v327
    %v406 = vpack.c.b16 %v330, %v329
    %v407 = vpack.c.b16 %v332, %v331
    %v408 = vpack.c.b16 %v334, %v333
    %v409 = vpack.c.b16 %v336, %v335
    %v410 = vpack.c.b16 %v338, %v337
    %v411 = vpack.c.b16 %v340, %v339
    %v412 = vpack.c.b16 %v342, %v341
    %v413 = vpack.c.b16 %v344, %v343
    %v414 = vpack.c.b16 %v346, %v345
    %v415 = vpack.c.b16 %v348, %v347
    %v416 = vpack.c.b16 %v350, %v349
    %v417 = vpack.c.b16 %v352, %v351
    %v418 = vpack.c.b16 %v354, %v353
    %v419 = vpack.c.b16 %v356, %v355
    %v420 = vpack.c.b16 %v358, %v357
    %v421 = vpack.c.b16 %v360, %v359
    %v422 = vpack.c.b16 %v362, %v361
    %v423 = vpack.c.b16 %v364, %v363
    %v424 = vpack.c.b16 %v366, %v365
    %v425 = vpack.c.b16 %v368, %v367
    %v426 = vpack.c.b16 %v370, %v369
    %v427 = vpack.c.b16 %v372, %v371
    %v428 = vpack.c.b16 %v374, %v373
    %v429 = vpack.c.b16 %v376, %v375
    %v430 = vpack.c.b16 %v378, %v377
    %v431 = vpack.c.b16 %v380, %v379
    %v432 = vpack.c.b16 %v382, %v381
    %v433 = vpack.c.b16 %v384, %v383
    %vm483 = vcmask 130048
    %v485 = vsel %vm483, %v83, 0
    %487 = vmatprep.subr.bf16.mxu0 0
    %488 = vmatpush1.bf16.msra.mxu0 %v392
    %489 = vmatprep.subr.bf16.mxu0 0
    %490 = vmatpush1.bf16.msra.mxu0 %v391
    %491 = vmatprep.subr.bf16.mxu0 0
    %492 = vmatpush1.bf16.msra.mxu0 %v390
    %493 = vmatprep.subr.bf16.mxu0 0
    %494 = vmatpush1.bf16.msra.mxu0 %v389
    %495 = vmatprep.subr.bf16.mxu0 0
    %496 = vmatpush1.bf16.msra.mxu0 %v388
    %497 = vmatprep.subr.bf16.mxu0 0
    %498 = vmatpush1.bf16.msra.mxu0 %v387
    %499 = vmatprep.subr.bf16.mxu0 0
    %500 = vmatpush1.bf16.msra.mxu0 %v386
    %501 = vmatprep.subr.bf16.mxu0 0
    %502 = vmatpush1.bf16.msra.mxu0 %v385
    %503 = vmatprep.subr.bf16.mxu0 0
    %504 = vmatpush2.bf16.msra.mxu0 %v400
    %505 = vmatprep.subr.bf16.mxu0 0
    %506 = vmatpush2.bf16.msra.mxu0 %v399
    %507 = vmatprep.subr.bf16.mxu0 0
    %508 = vmatpush2.bf16.msra.mxu0 %v398
    %509 = vmatprep.subr.bf16.mxu0 0
    %510 = vmatpush2.bf16.msra.mxu0 %v397
    %511 = vmatprep.subr.bf16.mxu0 0
    %512 = vmatpush2.bf16.msra.mxu0 %v396
    %513 = vmatprep.subr.bf16.mxu0 0
    %514 = vmatpush2.bf16.msra.mxu0 %v395
    %515 = vmatprep.subr.bf16.mxu0 0
    %516 = vmatpush2.bf16.msra.mxu0 %v394
    %517 = vmatprep.subr.bf16.mxu0 0
    %518 = vmatpush2.bf16.msra.mxu0 %v393
    %519 = vmatprep.mubr.bf16.mxu0 %v78
    %520 = vmatmul.mubr.bf16.gmra.mxu0 %v77
    %v521 = vpop.f32.mrf.mxu0
    %v522 = vadd.f32 %v187, %v521
    %v523 = vpop.f32.mrf.mxu0
    %v524 = vpop.f32.mrf.mxu0
    %v525 = vadd.f32 %v187, %v524
    %v526 = vpop.f32.mrf.mxu0
    %527 = vdwg.mxu0
    %528 = vmatprep.subr.bf16.mxu0 0
    %529 = vmatpush1.bf16.msra.mxu0 %v408
    %530 = vmatprep.subr.bf16.mxu0 0
    %531 = vmatpush1.bf16.msra.mxu0 %v407
    %532 = vmatprep.subr.bf16.mxu0 0
    %533 = vmatpush1.bf16.msra.mxu0 %v406
    %534 = vmatprep.subr.bf16.mxu0 0
    %535 = vmatpush1.bf16.msra.mxu0 %v405
    %536 = vmatprep.subr.bf16.mxu0 0
    %537 = vmatpush1.bf16.msra.mxu0 %v404
    %538 = vmatprep.subr.bf16.mxu0 0
    %539 = vmatpush1.bf16.msra.mxu0 %v403
    %540 = vmatprep.subr.bf16.mxu0 0
    %541 = vmatpush1.bf16.msra.mxu0 %v402
    %542 = vmatprep.subr.bf16.mxu0 0
    %543 = vmatpush1.bf16.msra.mxu0 %v401
    %544 = vmatprep.subr.bf16.mxu0 0
    %545 = vmatpush2.bf16.msra.mxu0 %v416
    %546 = vmatprep.subr.bf16.mxu0 0
    %547 = vmatpush2.bf16.msra.mxu0 %v415
    %548 = vmatprep.subr.bf16.mxu0 0
    %549 = vmatpush2.bf16.msra.mxu0 %v414
    %550 = vmatprep.subr.bf16.mxu0 0
    %551 = vmatpush2.bf16.msra.mxu0 %v413
    %552 = vmatprep.subr.bf16.mxu0 0
    %553 = vmatpush2.bf16.msra.mxu0 %v412
    %554 = vmatprep.subr.bf16.mxu0 0
    %555 = vmatpush2.bf16.msra.mxu0 %v411
    %556 = vmatprep.subr.bf16.mxu0 0
    %557 = vmatpush2.bf16.msra.mxu0 %v410
    %558 = vmatprep.subr.bf16.mxu0 0
    %559 = vmatpush2.bf16.msra.mxu0 %v409
    %560 = vmatprep.mubr.bf16.mxu0 %v80
    %561 = vmatmul.mubr.bf16.gmra.mxu0 %v79
    %v562 = vpop.f32.mrf.mxu0
    %v563 = vadd.f32 %v522, %v562
    %v564 = vpop.f32.mrf.mxu0
    %v565 = vpop.f32.mrf.mxu0
    %v566 = vadd.f32 %v525, %v565
    %v567 = vpop.f32.mrf.mxu0
    %568 = vdwg.mxu0
    %569 = vmatprep.subr.bf16.mxu0 0
    %570 = vmatpush1.bf16.msra.mxu0 %v424
    %571 = vmatprep.subr.bf16.mxu0 0
    %572 = vmatpush1.bf16.msra.mxu0 %v423
    %573 = vmatprep.subr.bf16.mxu0 0
    %574 = vmatpush1.bf16.msra.mxu0 %v422
    %575 = vmatprep.subr.bf16.mxu0 0
    %576 = vmatpush1.bf16.msra.mxu0 %v421
    %577 = vmatprep.subr.bf16.mxu0 0
    %578 = vmatpush1.bf16.msra.mxu0 %v420
    %579 = vmatprep.subr.bf16.mxu0 0
    %580 = vmatpush1.bf16.msra.mxu0 %v419
    %581 = vmatprep.subr.bf16.mxu0 0
    %582 = vmatpush1.bf16.msra.mxu0 %v418
    %583 = vmatprep.subr.bf16.mxu0 0
    %584 = vmatpush1.bf16.msra.mxu0 %v417
    %585 = vmatprep.subr.bf16.mxu0 0
    %586 = vmatpush2.bf16.msra.mxu0 %v432
    %587 = vmatprep.subr.bf16.mxu0 0
    %588 = vmatpush2.bf16.msra.mxu0 %v431
    %589 = vmatprep.subr.bf16.mxu0 0
    %590 = vmatpush2.bf16.msra.mxu0 %v430
    %591 = vmatprep.subr.bf16.mxu0 0
    %592 = vmatpush2.bf16.msra.mxu0 %v429
    %593 = vmatprep.subr.bf16.mxu0 0
    %594 = vmatpush2.bf16.msra.mxu0 %v428
    %595 = vmatprep.subr.bf16.mxu0 0
    %596 = vmatpush2.bf16.msra.mxu0 %v427
    %597 = vmatprep.subr.bf16.mxu0 0
    %598 = vmatpush2.bf16.msra.mxu0 %v426
    %599 = vmatprep.subr.bf16.mxu0 0
    %600 = vmatpush2.bf16.msra.mxu0 %v425
    %601 = vmatprep.mubr.bf16.mxu0 %v82
    %602 = vmatmul.mubr.bf16.gmra.mxu0 %v81
    %v603 = vpop.f32.mrf.mxu0
    %v604 = vadd.f32 %v563, %v603
    %v605 = vpop.f32.mrf.mxu0
    %v606 = vpop.f32.mrf.mxu0
    %v607 = vadd.f32 %v566, %v606
    %v608 = vpop.f32.mrf.mxu0
    %609 = vdwg.mxu0
    %610 = vmatprep.subr.bf16.mxu0 0
    %611 = vmatpush1.bf16.msra.mxu0 0
    %612 = vmatprep.subr.bf16.mxu0 0
    %613 = vmatpush1.bf16.msra.mxu0 0
    %614 = vmatprep.subr.bf16.mxu0 0
    %615 = vmatpush1.bf16.msra.mxu0 0
    %616 = vmatprep.subr.bf16.mxu0 0
    %617 = vmatpush1.bf16.msra.mxu0 0
    %618 = vmatprep.subr.bf16.mxu0 0
    %619 = vmatpush1.bf16.msra.mxu0 0
    %620 = vmatprep.subr.bf16.mxu0 0
    %621 = vmatpush1.bf16.msra.mxu0 0
    %622 = vmatprep.subr.bf16.mxu0 0
    %623 = vmatpush1.bf16.msra.mxu0 0
    %624 = vmatprep.subr.bf16.mxu0 0
    %625 = vmatpush1.bf16.msra.mxu0 %v433
    %626 = vmatprep.subr.bf16.mxu0 0
    %627 = vmatpush2.bf16.msra.mxu0 0
    %628 = vmatprep.subr.bf16.mxu0 0
    %629 = vmatpush2.bf16.msra.mxu0 0
    %630 = vmatprep.subr.bf16.mxu0 0
    %631 = vmatpush2.bf16.msra.mxu0 0
    %632 = vmatprep.subr.bf16.mxu0 0
    %633 = vmatpush2.bf16.msra.mxu0 0
    %634 = vmatprep.subr.bf16.mxu0 0
    %635 = vmatpush2.bf16.msra.mxu0 0
    %636 = vmatprep.subr.bf16.mxu0 0
    %637 = vmatpush2.bf16.msra.mxu0 0
    %638 = vmatprep.subr.bf16.mxu0 0
    %639 = vmatpush2.bf16.msra.mxu0 0
    %640 = vmatprep.subr.bf16.mxu0 0
    %641 = vmatpush2.bf16.msra.mxu0 0
    %642 = vmatprep.mubr.bf16.mxu0 0
    %643 = vmatmul.mubr.bf16.gmra.mxu0 %v485
    %v644 = vpop.f32.mrf.mxu0
    %v645 = vadd.f32 %v604, %v644
    %v646 = vpop.f32.mrf.mxu0
    %v647 = vpop.f32.mrf.mxu0
    %v648 = vadd.f32 %v607, %v647
    %v649 = vpop.f32.mrf.mxu0
    %650 = vdwg.mxu0
    %v651 = vmax.f32 %v645, 0.0
    %v652 = vmax.f32 %v648, 0.0
    %v653 = vpack.c.bf16 %v652, %v651
    %v654 = vld [vmem:[#allocation7] sm:$0xf]
    %v655 = vld [vmem:[#allocation7 + $0x4] sm:$0xf]
    %v656 = vld [vmem:[#allocation7 + $0x8] sm:$0xf]
    %v657 = vld [vmem:[#allocation7 + $0xc] sm:$0xf]
    %v658 = vld [vmem:[#allocation7 + $0x10] sm:$0xf]
    %v659 = vld [vmem:[#allocation7 + $0x14] sm:$0xf]
    %v660 = vld [vmem:[#allocation7 + $0x18] sm:$0xf]
    %v661 = vld [vmem:[#allocation7 + $0x1c] sm:$0xf]
    %v662 = vld [vmem:[#allocation7 + $0x20] sm:$0xf]
    %v663 = vld [vmem:[#allocation7 + $0x24] sm:$0xf]
    %v664 = vld [vmem:[#allocation7 + $0x28] sm:$0xf]
    %v665 = vld [vmem:[#allocation7 + $0x2c] sm:$0xf]
    %v666 = vld [vmem:[#allocation7 + $0x30] sm:$0xf]
    %v667 = vld [vmem:[#allocation7 + $0x34] sm:$0xf]
    %v668 = vld [vmem:[#allocation7 + $0x38] sm:$0xf]
    %v669 = vld [vmem:[#allocation7 + $0x3c] sm:$0xf]
    %v670 = vld [vmem:[%s4] sm:$0x1]
    %v672 = vlaneseq
    %v673 = vshrl.u32 %v672, 7
    %v674 = vsub.s32 0, %v673
    %v675 = vrot.slane %v670, %v674
    %v693 = vunpack.c.l.b16 %v654
    %v694 = vunpack.c.l.b16 %v655
    %v695 = vunpack.c.l.b16 %v656
    %v696 = vunpack.c.l.b16 %v657
    %v697 = vunpack.c.l.b16 %v658
    %v698 = vunpack.c.l.b16 %v659
    %v699 = vunpack.c.l.b16 %v660
    %v700 = vunpack.c.l.b16 %v661
    %v701 = vunpack.c.l.b16 %v662
    %v702 = vunpack.c.l.b16 %v663
    %v703 = vunpack.c.l.b16 %v664
    %v704 = vunpack.c.l.b16 %v665
    %v705 = vunpack.c.l.b16 %v666
    %v706 = vunpack.c.l.b16 %v667
    %v707 = vunpack.c.l.b16 %v668
    %v708 = vunpack.c.l.b16 %v669
    %v709 = vpack.c.b16 %v694, %v693
    %v710 = vpack.c.b16 %v696, %v695
    %v711 = vpack.c.b16 %v698, %v697
    %v712 = vpack.c.b16 %v700, %v699
    %v713 = vpack.c.b16 %v702, %v701
    %v714 = vpack.c.b16 %v704, %v703
    %v715 = vpack.c.b16 %v706, %v705
    %v716 = vpack.c.b16 %v708, %v707
    %725 = vmatprep.subr.bf16.mxu0 0
    %726 = vmatpush1.bf16.msra.mxu0 %v716
    %727 = vmatprep.subr.bf16.mxu0 0
    %728 = vmatpush1.bf16.msra.mxu0 %v715
    %729 = vmatprep.subr.bf16.mxu0 0
    %730 = vmatpush1.bf16.msra.mxu0 %v714
    %731 = vmatprep.subr.bf16.mxu0 0
    %732 = vmatpush1.bf16.msra.mxu0 %v713
    %733 = vmatprep.subr.bf16.mxu0 0
    %734 = vmatpush1.bf16.msra.mxu0 %v712
    %735 = vmatprep.subr.bf16.mxu0 0
    %736 = vmatpush1.bf16.msra.mxu0 %v711
    %737 = vmatprep.subr.bf16.mxu0 0
    %738 = vmatpush1.bf16.msra.mxu0 %v710
    %739 = vmatprep.subr.bf16.mxu0 0
    %740 = vmatpush1.bf16.msra.mxu0 %v709
    %741 = vmatprep.subr.bf16.mxu0 0
    %742 = vmatpush2.bf16.msra.mxu0 0
    %743 = vmatprep.subr.bf16.mxu0 0
    %744 = vmatpush2.bf16.msra.mxu0 0
    %745 = vmatprep.subr.bf16.mxu0 0
    %746 = vmatpush2.bf16.msra.mxu0 0
    %747 = vmatprep.subr.bf16.mxu0 0
    %748 = vmatpush2.bf16.msra.mxu0 0
    %749 = vmatprep.subr.bf16.mxu0 0
    %750 = vmatpush2.bf16.msra.mxu0 0
    %751 = vmatprep.subr.bf16.mxu0 0
    %752 = vmatpush2.bf16.msra.mxu0 0
    %753 = vmatprep.subr.bf16.mxu0 0
    %754 = vmatpush2.bf16.msra.mxu0 0
    %755 = vmatprep.subr.bf16.mxu0 0
    %756 = vmatpush2.bf16.msra.mxu0 0
    %757 = vmatprep.mubr.bf16.mxu0 0
    %758 = vmatmul.mubr.bf16.gmra.mxu0 %v653
    %v759 = vpop.f32.mrf.mxu0
    %v760 = vadd.f32 %v675, %v759
    %v761 = vpop.f32.mrf.mxu0
    %v762 = vpop.f32.mrf.mxu0
    %v763 = vadd.f32 %v675, %v762
    %v764 = vpop.f32.mrf.mxu0
    %765 = vdwg.mxu0
    %766 = vmax.xlane.f32.xlu0 %v760
    %v767 = vpop.xlane.xlu0 %766
    %768 = vmax.xlane.f32.xlu0 %v763
    %v769 = vpop.xlane.xlu0 %768
    %v770 = vsub.f32 %v760, %v767
    %v771 = vsub.f32 %v763, %v769
    %v772 = vmul.f32 %v770, 1.442695
    %v773 = vpow.pop %v772
    %v774 = vmul.f32 %v771, 1.442695
    %v775 = vpow.pop %v774
    %776 = vadd.xlane.f32.xlu0 %v773
    %v777 = vpop.xlane.xlu0 %776
    %778 = vadd.xlane.f32.xlu0 %v775
    %v779 = vpop.xlane.xlu0 %778
    %v780 = vlog2.pop %v777
    %v781 = vmul.f32 %v780, 0.6931472
    %v782 = vlog2.pop %v779
    %v783 = vmul.f32 %v782, 0.6931472
    %v784 = vsub.f32 %v770, %v781
    %v785 = vsub.f32 %v771, %v783
    %786 = vst [vmem:[#allocation8] sm:$0xff] %v784
    %787 = vst [vmem:[#allocation8 + $0x8] sm:$0xff] %v785
    // Predicated region
    $region34: #{tpu_custom_call.1} parent=1 // pred_check
      _
    $region35: #{tpu_custom_call.1} parent=1 // pred_check_branch
      %789 = sbr.rel (0) target = $region37
    $region36: #{tpu_custom_call.1} parent=1 // pred_region
      %s791 = ssub.s32 256, 256
      %792 = vsyncadd [#allocation4], %s791
      %s793 = sshll.u32 [#allocation8], 4
      %s794 = int_to_ptr.vmem [resolvable:$true] %s793
      %799 = dma.vmem_to_hbm [thread:$0]  %s794, 256, %s5, [#allocation4], 128, 128, 8
    $region37: #{tpu_custom_call.1} parent=1 // pred_fallthru
      _
    // Predicated region
    $region38: #{tpu_custom_call.1} parent=1 // pred_check
      _
    $region39: #{tpu_custom_call.1} parent=1 // pred_check_branch
      %801 = sbr.rel (0) target = $region41
    $region40: #{tpu_custom_call.1} parent=1 // pred_region
      %802 = dma.done [#allocation4], 256
    $region41: #{tpu_custom_call.1} parent=1 // pred_fallthru
      _
    %803 = vsyncpa [#allocation3], 1
    %804 = vsyncpa [#allocation6], 1
    %805 = vsyncpa [#allocation4], 1

</llo_original>
